<compile_context>
chip_gen: v7x
topology: tpu7x:2x2x1
jax: 0.10.0
libtpu: 0.0.40
codegen_flags: <defaults>
</compile_context>

<pallas_src>
import functools

import jax
import jax.numpy as jnp
from jax.experimental import pallas as pl
from jax.experimental.pallas import tpu as pltpu

_MIB = 1 << 20
# Keep the (conservatively double-buffered) working set under this so the same
# tiling fits every generation (v7x has 64 MiB physical VMEM per TensorCore).
_VMEM_BUDGET = 38 * _MIB
_VMEM_LIMIT_CAP = 48 * _MIB
_FAST_PATH_WEIGHT_BYTES = 8 * _MIB


def _round_up(x: int, m: int) -> int:
    return ((x + m - 1) // m) * m


def _pick_tile(dim: int, unit: int, cap: int) -> int:
    """Largest multiple of `unit` that divides `dim` (already unit-aligned) and is <= cap."""
    best = unit
    t = unit
    limit = min(dim, cap)
    while t <= limit:
        if dim % t == 0:
            best = t
        t += unit
    return best


def _maybe_pad2d(a, rows: int, cols: int):
    r, c = a.shape
    if r == rows and c == cols:
        return a  # skip jnp.pad (it would materialize a full HBM copy)
    return jnp.pad(a, ((0, rows - r), (0, cols - c)))


def _vmem_limit(budget: int) -> int:
    return int(min(_VMEM_LIMIT_CAP, max(16 * _MIB, _round_up(budget, _MIB) + 4 * _MIB)))


# --------------------------------------------------------------------------
# Kernels
# --------------------------------------------------------------------------
def _linear_resident_kernel(x_ref, wt_ref, b_ref, o_ref, *, use_bf16):
    # x_ref : (tm, K)  input tile           wt_ref: (K, N)  full weight (resident)
    # b_ref : (1, N)   full bias            o_ref : (tm, N) output tile
    x = x_ref[...]
    w = wt_ref[...]
    if use_bf16:
        x = x.astype(jnp.bfloat16)
        w = w.astype(jnp.bfloat16)
    acc = jnp.dot(x, w, preferred_element_type=jnp.float32)
    o_ref[...] = (acc + b_ref[...].astype(jnp.float32)).astype(o_ref.dtype)


def _linear_tiled_kernel(x_ref, wt_ref, b_ref, o_ref, acc_ref, *, use_bf16):
    # x_ref : (tm, tk)    wt_ref: (tk, tn)   b_ref: (1, tn)
    # o_ref : (tm, tn)    acc_ref: (tm, tn) f32 scratch, persistent across k
    k = pl.program_id(2)

    @pl.when(k == 0)
    def _init():
        # Seed the accumulator with the bias: removes the zero-fill and the
        # extra (tm, tn) VPU add at writeback.
        acc_ref[...] = jnp.broadcast_to(
            b_ref[...].astype(jnp.float32), acc_ref.shape)

    x = x_ref[...]
    w = wt_ref[...]
    if use_bf16:
        x = x.astype(jnp.bfloat16)
        w = w.astype(jnp.bfloat16)
    acc_ref[...] += jnp.dot(x, w, preferred_element_type=jnp.float32)

    @pl.when(k == pl.num_programs(2) - 1)
    def _writeback():
        o_ref[...] = acc_ref[...].astype(o_ref.dtype)


# --------------------------------------------------------------------------
# Wrapper
# --------------------------------------------------------------------------
def linear_forward(x, weight, bias, *, use_bf16_matmul=False, force_tiled=False):
    """x: (B, D_in), weight: (D_out, D_in), bias: (D_out,) -> (B, D_out)."""
    B, D_in = x.shape
    D_out, D_in_w = weight.shape
    assert D_in_w == D_in

    itemsize = jnp.dtype(x.dtype).itemsize

    # Minimal hardware alignment only (no over-rounding to match fixed tiles).
    M = _round_up(B, 8)
    N = _round_up(D_out, 128)
    K = _round_up(D_in, 128)

    # One-time wrapper transpose to the canonical (K, N) MXU layout; amortized
    # over every batch tile and avoids any per-tile transpose inside the kernel.
    wt_p = _maybe_pad2d(weight.T, K, N)
    x_p = _maybe_pad2d(x, M, K)
    b_p = bias.reshape(1, D_out)
    if N != D_out:
        b_p = jnp.pad(b_p, ((0, 0), (0, N - D_out)))

    weight_bytes = K * N * itemsize
    use_fast = (not force_tiled) and weight_bytes <= _FAST_PATH_WEIGHT_BYTES

    # ---------------- weight-resident fast path ----------------
    if use_fast:
        tm = _pick_tile(M, 8, 512)
        # v7x has 2 TensorCores: prefer >=2 parallel grid steps when possible.
        if M // tm < 2 and M >= 16:
            tm = _pick_tile(M, 8, max(8, tm // 2))

        def fast_budget(tm_):
            return (2 * (tm_ * K + K * N + tm_ * N) + N) * itemsize

        while tm > 8 and fast_budget(tm) > _VMEM_BUDGET:
            tm = _pick_tile(M, 8, tm // 2)
        use_fast = fast_budget(tm) <= _VMEM_BUDGET

    if use_fast:
        grid = (M // tm,)
        kernel = functools.partial(_linear_resident_kernel,
                                   use_bf16=use_bf16_matmul)
        out_p = pl.pallas_call(
            kernel,
            out_shape=jax.ShapeDtypeStruct((M, N), x.dtype),
            grid_spec=pltpu.PrefetchScalarGridSpec(
                num_scalar_prefetch=0,
                grid=grid,
                in_specs=[
                    pl.BlockSpec((tm, K), lambda i: (i, 0)),   # x tile
                    pl.BlockSpec((K, N), lambda i: (0, 0)),    # full weight, resident
                    pl.BlockSpec((1, N), lambda i: (0, 0)),    # full bias
                ],
                out_specs=pl.BlockSpec((tm, N), lambda i: (i, 0)),
            ),
            compiler_params=pltpu.CompilerParams(
                dimension_semantics=("parallel",),
                vmem_limit_bytes=_vmem_limit(fast_budget(tm)),
            ),
        )(x_p, wt_p, b_p)
        return out_p[:B, :D_out]

    # ---------------- tiled 3-D grid path ----------------
    tm = _pick_tile(M, 8, 512)
    tn = _pick_tile(N, 128, 512)
    tk = _pick_tile(K, 128, 1024)

    # v7x: keep both TensorCores busy when the parallel extent would be 1.
    if (M // tm) * (N // tn) < 2:
        if M // tm < 2 and M >= 16:
            tm = _pick_tile(M, 8, max(8, tm // 2))
        elif N // tn < 2 and N >= 256:
            tn = _pick_tile(N, 128, max(128, tn // 2))

    def tiled_budget(tm_, tn_, tk_):
        return ((2 * (tm_ * tk_ + tk_ * tn_ + tm_ * tn_) + tn_) * itemsize
                + tm_ * tn_ * 4)  # + f32 accumulator scratch

    while tiled_budget(tm, tn, tk) > _VMEM_BUDGET and tk > 128:
        tk = _pick_tile(K, 128, tk // 2)
    while tiled_budget(tm, tn, tk) > _VMEM_BUDGET and tn > 128:
        tn = _pick_tile(N, 128, tn // 2)
    while tiled_budget(tm, tn, tk) > _VMEM_BUDGET and tm > 8:
        tm = _pick_tile(M, 8, tm // 2)

    grid = (M // tm, N // tn, K // tk)
    kernel = functools.partial(_linear_tiled_kernel, use_bf16=use_bf16_matmul)
    out_p = pl.pallas_call(
        kernel,
        out_shape=jax.ShapeDtypeStruct((M, N), x.dtype),
        grid_spec=pltpu.PrefetchScalarGridSpec(
            num_scalar_prefetch=0,
            grid=grid,
            in_specs=[
                pl.BlockSpec((tm, tk), lambda i, j, k: (i, k)),   # x
                pl.BlockSpec((tk, tn), lambda i, j, k: (k, j)),   # weight^T (K, N)
                pl.BlockSpec((1, tn), lambda i, j, k: (0, j)),    # bias
            ],
            out_specs=pl.BlockSpec((tm, tn), lambda i, j, k: (i, j)),
            scratch_shapes=[pltpu.VMEM((tm, tn), jnp.float32)],
        ),
        compiler_params=pltpu.CompilerParams(
            dimension_semantics=("parallel", "parallel", "arbitrary"),
            vmem_limit_bytes=_vmem_limit(tiled_budget(tm, tn, tk)),
        ),
    )(x_p, wt_p, b_p)
    return out_p[:B, :D_out]


# TODO(synk): the module's `evaluate()` (DataLoader loop + loss averaging) is a
# host-side training utility, not a device kernel; only forward() is implemented.

if __name__ == "__main__":
    # Small shapes consistent with nn.Linear(input_dim, output_dim).
    batch, input_dim, output_dim = 8, 32, 16

    key = jax.random.PRNGKey(0)
    kx, kw, kb = jax.random.split(key, 3)

    x = jax.random.normal(kx, (batch, input_dim), dtype=jnp.float32)
    bound = 1.0 / (input_dim ** 0.5)  # mimic nn.Linear uniform init bounds
    weight = jax.random.uniform(kw, (output_dim, input_dim),
                                minval=-bound, maxval=bound, dtype=jnp.float32)
    bias = jax.random.uniform(kb, (output_dim,),
                              minval=-bound, maxval=bound, dtype=jnp.float32)

    out = jax.block_until_ready(linear_forward(x, weight, bias))
    ref = x @ weight.T + bias
    assert out.shape == (batch, output_dim)
    assert jnp.allclose(out, ref, atol=1e-5, rtol=1e-5)

    # Larger config: exercises the weight-resident fast path with a multi-step
    # batch grid (and no padding: 384 / 1024 are already 128-aligned).
    B2, Din2, Dout2 = 512, 1024, 384
    k2x, k2w, k2b = jax.random.split(jax.random.PRNGKey(1), 3)
    x2 = jax.random.normal(k2x, (B2, Din2), dtype=jnp.float32)
    w2 = jax.random.normal(k2w, (Dout2, Din2), dtype=jnp.float32) * 0.02
    b2 = jax.random.normal(k2b, (Dout2,), dtype=jnp.float32)
    out2 = jax.block_until_ready(linear_forward(x2, w2, b2))
    ref2 = x2 @ w2.T + b2
    assert out2.shape == (B2, Dout2)
    assert jnp.allclose(out2, ref2, atol=1e-3, rtol=1e-3)

    # Exercise the tiled 3-D grid path (multi-step k reduction) explicitly.
    B3, Din3, Dout3 = 256, 2048, 384
    k3x, k3w, k3b = jax.random.split(jax.random.PRNGKey(2), 3)
    x3 = jax.random.normal(k3x, (B3, Din3), dtype=jnp.float32)
    w3 = jax.random.normal(k3w, (Dout3, Din3), dtype=jnp.float32) * 0.02
    b3 = jax.random.normal(k3b, (Dout3,), dtype=jnp.float32)
    out3 = jax.block_until_ready(linear_forward(x3, w3, b3, force_tiled=True))
    ref3 = x3 @ w3.T + b3
    assert out3.shape == (B3, Dout3)
    assert jnp.allclose(out3, ref3, atol=1e-3, rtol=1e-3)

    print("KERNEL_OK")
</pallas_src>

<mosaic_0001>
module attributes {stable_mosaic.version = 11 : i64} {
  func.func @_linear_resident_kernel(%arg0: i32, %arg1: memref<8x128xf32, #tpu.memory_space<vmem>>, %arg2: memref<128x128xf32, #tpu.memory_space<vmem>>, %arg3: memref<1x128xf32, #tpu.memory_space<vmem>>, %arg4: memref<8x128xf32, #tpu.memory_space<vmem>>) attributes {dimension_semantics = [#tpu.dimension_semantics<parallel>], iteration_bounds = array<i64: 1>, scalar_prefetch = 0 : i64, scratch_operands = 0 : i64, tpu.core_type = #tpu.core_type<tc>, window_params = [{transform_indices = @transform_0, window_bounds = array<i64: 8, 128>}, {pipeline_mode = #tpu.pipeline_mode<synchronous>, transform_indices = @transform_1, window_bounds = array<i64: 128, 128>}, {pipeline_mode = #tpu.pipeline_mode<synchronous>, transform_indices = @transform_2, window_bounds = array<i64: 1, 128>}, {transform_indices = @transform_3, window_bounds = array<i64: 8, 128>}]} {
    %c0 = arith.constant 0 : index
    %c0_0 = arith.constant 0 : index
    %0 = vector.load %arg1[%c0, %c0_0] : memref<8x128xf32, #tpu.memory_space<vmem>>, vector<8x128xf32>
    %c0_1 = arith.constant 0 : index
    %c0_2 = arith.constant 0 : index
    %1 = vector.load %arg2[%c0_1, %c0_2] : memref<128x128xf32, #tpu.memory_space<vmem>>, vector<128x128xf32>
    %cst = arith.constant dense<0.000000e+00> : vector<8x128xf32>
    %2 = tpu.matmul %0, %1, %cst {dimension_numbers = #tpu.dot_dimension_numbers<[1], [0], [0], [1], [0, 0, 1, 1], [], []>} : vector<8x128xf32>, vector<128x128xf32>, vector<8x128xf32> -> vector<8x128xf32>
    %c0_3 = arith.constant 0 : index
    %c0_4 = arith.constant 0 : index
    %3 = vector.load %arg3[%c0_3, %c0_4] : memref<1x128xf32, #tpu.memory_space<vmem>>, vector<1x128xf32>
    %4 = vector.broadcast %3 : vector<1x128xf32> to vector<8x128xf32>
    %5 = arith.addf %2, %4 : vector<8x128xf32>
    %c0_5 = arith.constant 0 : index
    %c0_6 = arith.constant 0 : index
    %6 = vector.load %arg4[%c0_5, %c0_6] : memref<8x128xf32, #tpu.memory_space<vmem>>, vector<8x128xf32>
    tpu.vector_store %arg4[%c0_5, %c0_6], %5 {strides = array<i32>} : memref<8x128xf32, #tpu.memory_space<vmem>>, vector<8x128xf32>,
    return
  }
  func.func @transform_0(%arg0: i32) -> (i32, i32) {
    %c0_i32 = arith.constant 0 : i32
    %c0_i32_0 = arith.constant 0 : i32
    return %arg0, %c0_i32 : i32, i32
  }
  func.func @transform_1(%arg0: i32) -> (i32, i32) {
    %c0_i32 = arith.constant 0 : i32
    %c0_i32_0 = arith.constant 0 : i32
    %c0_i32_1 = arith.constant 0 : i32
    return %c0_i32, %c0_i32_0 : i32, i32
  }
  func.func @transform_2(%arg0: i32) -> (i32, i32) {
    %c0_i32 = arith.constant 0 : i32
    %c0_i32_0 = arith.constant 0 : i32
    %c0_i32_1 = arith.constant 0 : i32
    return %c0_i32, %c0_i32_0 : i32, i32
  }
  func.func @transform_3(%arg0: i32) -> (i32, i32) {
    %c0_i32 = arith.constant 0 : i32
    %c0_i32_0 = arith.constant 0 : i32
    return %arg0, %c0_i32 : i32, i32
  }
}

</mosaic_0001>

<llo_original>
// kernel: tpu_custom_call.1
$region0: #{tpu_custom_call.1}
  #allocation0 [shape = 'u32[]', space=smem, size = 0x4, offset = 0x4, fixed_abs, tag = 'smem constant byte address 0x4 - core index']
  #allocation1 [shape = 'u32[144,128]{1,0:T(1,128)}', space=vmem, size = 0x12000, scoped, tag = 'internal scratch']
  %s0 = inlined_call_operand.hbm [shape: f32[8,128], index: 0, kind: input, shape index: {}]
  %s1 = inlined_call_operand.hbm [shape: f32[128,128], index: 1, kind: input, shape index: {}]
  %s2 = inlined_call_operand.vmem [shape: f32[1,128], index: 2, kind: input, shape index: {}]
  %s3 = inlined_call_operand.hbm [shape: f32[8,128], index: 3, kind: output, shape index: {}]
  %s4 = sld [smem:[#allocation0]]
  $region30: #{tpu_custom_call.1} parent=0
    _
  %s6 = ssub.s32 1, %s4
  %s7 = scalar_select 0, %s6, %s4
  $region1: #{tpu_custom_call.1} parent=0
    #allocation2 [shape = 'u8[4096]{0}', space=vmem, size = 0x1000, scoped, tag = 'input window, operand 0, single buffered']
    #allocation3 [shape = 's32[1]{0}', space=sflag, size = 0x4, scoped, tag = 'scoped memory for tpu_custom_call.1']
    #allocation4 [shape = 's32[1]{0}', space=sflag, size = 0x4, scoped, tag = 'scoped memory for tpu_custom_call.1']
    #allocation5 [shape = 'u8[65536]{0}', space=vmem, size = 0x10000, scoped, tag = 'input window, operand 1, single buffered']
    #allocation6 [shape = 's32[1]{0}', space=sflag, size = 0x4, scoped, tag = 'scoped memory for tpu_custom_call.1']
    #allocation7 [shape = 'u8[4096]{0}', space=vmem, size = 0x1000, scoped, tag = 'output window, operand 0, single buffered']
    %8 = vsyncpa [#allocation3], 0
    %9 = vsyncpa [#allocation6], 0
    %10 = vsyncpa [#allocation4], 0
    // Predicated region
    $region2: #{tpu_custom_call.1} parent=1 // pred_check
      _
    $region3: #{tpu_custom_call.1} parent=1 // pred_check_branch
      %12 = sbr.rel (0) target = $region5
    $region4: #{tpu_custom_call.1} parent=1 // pred_region
      %s14 = ssub.s32 128, 128
      %15 = vsyncadd [#allocation3], %s14
      %s17 = sshll.u32 [#allocation2], 4
      %s18 = int_to_ptr.vmem [resolvable:$true] %s17
      %20 = dma.hbm_to_vmem [thread:$0]  %s0, 128, %s18, [#allocation3]
    $region5: #{tpu_custom_call.1} parent=1 // pred_fallthru
      _
    // Predicated region
    $region6: #{tpu_custom_call.1} parent=1 // pred_check
      _
    $region7: #{tpu_custom_call.1} parent=1 // pred_check_branch
      %22 = sbr.rel (0) target = $region9
    $region8: #{tpu_custom_call.1} parent=1 // pred_region
      %s24 = ssub.s32 2048, 2048
      %25 = vsyncadd [#allocation6], %s24
      %s26 = sshll.u32 [#allocation5], 4
      %s27 = int_to_ptr.vmem [resolvable:$true] %s26
      %32 = dma.hbm_to_vmem [thread:$0]  %s1, 2048, %s27, [#allocation6], 128, 128, 8
    $region9: #{tpu_custom_call.1} parent=1 // pred_fallthru
      _
    // Predicated region
    $region10: #{tpu_custom_call.1} parent=1 // pred_check
      _
    $region11: #{tpu_custom_call.1} parent=1 // pred_check_branch
      %34 = sbr.rel (0) target = $region13
    $region12: #{tpu_custom_call.1} parent=1 // pred_region
      _
    $region13: #{tpu_custom_call.1} parent=1 // pred_fallthru
      _
    // Predicated region
    $region14: #{tpu_custom_call.1} parent=1 // pred_check
      _
    $region15: #{tpu_custom_call.1} parent=1 // pred_check_branch
      %36 = sbr.rel (0) target = $region17
    $region16: #{tpu_custom_call.1} parent=1 // pred_region
      %37 = dma.done [#allocation3], 128
    $region17: #{tpu_custom_call.1} parent=1 // pred_fallthru
      _
    // Predicated region
    $region18: #{tpu_custom_call.1} parent=1 // pred_check
      _
    $region19: #{tpu_custom_call.1} parent=1 // pred_check_branch
      %39 = sbr.rel (0) target = $region21
    $region20: #{tpu_custom_call.1} parent=1 // pred_region
      %40 = dma.done [#allocation6], 2048
    $region21: #{tpu_custom_call.1} parent=1 // pred_fallthru
      _
    %v41 = vld [vmem:[#allocation2] sm:$0xff]
    %v42 = vld [vmem:[#allocation5] sm:$0xff]
    %v43 = vld [vmem:[#allocation5 + $0x8] sm:$0xff]
    %v44 = vld [vmem:[#allocation5 + $0x10] sm:$0xff]
    %v45 = vld [vmem:[#allocation5 + $0x18] sm:$0xff]
    %v46 = vld [vmem:[#allocation5 + $0x20] sm:$0xff]
    %v47 = vld [vmem:[#allocation5 + $0x28] sm:$0xff]
    %v48 = vld [vmem:[#allocation5 + $0x30] sm:$0xff]
    %v49 = vld [vmem:[#allocation5 + $0x38] sm:$0xff]
    %v50 = vld [vmem:[#allocation5 + $0x40] sm:$0xff]
    %v51 = vld [vmem:[#allocation5 + $0x48] sm:$0xff]
    %v52 = vld [vmem:[#allocation5 + $0x50] sm:$0xff]
    %v53 = vld [vmem:[#allocation5 + $0x58] sm:$0xff]
    %v54 = vld [vmem:[#allocation5 + $0x60] sm:$0xff]
    %v55 = vld [vmem:[#allocation5 + $0x68] sm:$0xff]
    %v56 = vld [vmem:[#allocation5 + $0x70] sm:$0xff]
    %v57 = vld [vmem:[#allocation5 + $0x78] sm:$0xff]
    %v58 = vld [vmem:[%s2] sm:$0x1]
    %v60 = vlaneseq
    %v61 = vshrl.u32 %v60, 7
    %v62 = vsub.s32 0, %v61
    %v63 = vrot.slane %v58, %v62
    %65 = vmatprep.subr.mxu0 0.0
    %66 = vmatpush1.msra.mxu0 %v42
    %67 = vmatprep.subr.mxu0 0.0
    %68 = vmatpush1.msra.mxu0 %v43
    %69 = vmatprep.subr.mxu0 0.0
    %70 = vmatpush1.msra.mxu0 %v44
    %71 = vmatprep.subr.mxu0 0.0
    %72 = vmatpush1.msra.mxu0 %v45
    %73 = vmatprep.subr.mxu0 0.0
    %74 = vmatpush1.msra.mxu0 %v46
    %75 = vmatprep.subr.mxu0 0.0
    %76 = vmatpush1.msra.mxu0 %v47
    %77 = vmatprep.subr.mxu0 0.0
    %78 = vmatpush1.msra.mxu0 %v48
    %79 = vmatprep.subr.mxu0 0.0
    %80 = vmatpush1.msra.mxu0 %v49
    %81 = vmatprep.subr.mxu0 0.0
    %82 = vmatpush1.msra.mxu0 %v50
    %83 = vmatprep.subr.mxu0 0.0
    %84 = vmatpush1.msra.mxu0 %v51
    %85 = vmatprep.subr.mxu0 0.0
    %86 = vmatpush1.msra.mxu0 %v52
    %87 = vmatprep.subr.mxu0 0.0
    %88 = vmatpush1.msra.mxu0 %v53
    %89 = vmatprep.subr.mxu0 0.0
    %90 = vmatpush1.msra.mxu0 %v54
    %91 = vmatprep.subr.mxu0 0.0
    %92 = vmatpush1.msra.mxu0 %v55
    %93 = vmatprep.subr.mxu0 0.0
    %94 = vmatpush1.msra.mxu0 %v56
    %95 = vmatprep.subr.mxu0 0.0
    %96 = vmatpush1.msra.mxu0 %v57
    %97 = vmatprep.subr.mxu0 0.0
    %98 = vmatpush1.msra.mxu0 0.0
    %99 = vmatprep.subr.mxu0 0.0
    %100 = vmatpush1.msra.mxu0 0.0
    %101 = vmatprep.subr.mxu0 0.0
    %102 = vmatpush1.msra.mxu0 0.0
    %103 = vmatprep.subr.mxu0 0.0
    %104 = vmatpush1.msra.mxu0 0.0
    %105 = vmatprep.subr.mxu0 0.0
    %106 = vmatpush1.msra.mxu0 0.0
    %107 = vmatprep.subr.mxu0 0.0
    %108 = vmatpush1.msra.mxu0 0.0
    %109 = vmatprep.subr.mxu0 0.0
    %110 = vmatpush1.msra.mxu0 0.0
    %111 = vmatprep.subr.mxu0 0.0
    %112 = vmatpush1.msra.mxu0 0.0
    %113 = vmatprep.subr.mxu0 0.0
    %114 = vmatpush1.msra.mxu0 0.0
    %115 = vmatprep.subr.mxu0 0.0
    %116 = vmatpush1.msra.mxu0 0.0
    %117 = vmatprep.subr.mxu0 0.0
    %118 = vmatpush1.msra.mxu0 0.0
    %119 = vmatprep.subr.mxu0 0.0
    %120 = vmatpush1.msra.mxu0 0.0
    %121 = vmatprep.subr.mxu0 0.0
    %122 = vmatpush1.msra.mxu0 0.0
    %123 = vmatprep.subr.mxu0 0.0
    %124 = vmatpush1.msra.mxu0 0.0
    %125 = vmatprep.subr.mxu0 0.0
    %126 = vmatpush1.msra.mxu0 0.0
    %127 = vmatprep.subr.mxu0 0.0
    %128 = vmatpush1.msra.mxu0 0.0
    %129 = vmatprep.mubr.f32.mxu0 0.0
    %130 = vmatmul.mubr.f32.gmra.mrb[0].mxu0 %v41
    %v131 = vpop.f32.mrb[0].mxu0
    %v132 = vadd.f32 %v63, %v131
    %v133 = vpop.f32.mrb[0].mxu0
    %134 = vdwg.mxu0
    %135 = vst [vmem:[#allocation7] sm:$0xff] %v132
    // Predicated region
    $region22: #{tpu_custom_call.1} parent=1 // pred_check
      _
    $region23: #{tpu_custom_call.1} parent=1 // pred_check_branch
      %137 = sbr.rel (0) target = $region25
    $region24: #{tpu_custom_call.1} parent=1 // pred_region
      %s139 = ssub.s32 128, 128
      %140 = vsyncadd [#allocation4], %s139
      %s142 = sshll.u32 [#allocation7], 4
      %s143 = int_to_ptr.vmem [resolvable:$true] %s142
      %145 = dma.vmem_to_hbm [thread:$0]  %s143, 128, %s3, [#allocation4]
    $region25: #{tpu_custom_call.1} parent=1 // pred_fallthru
      _
    // Predicated region
    $region26: #{tpu_custom_call.1} parent=1 // pred_check
      _
    $region27: #{tpu_custom_call.1} parent=1 // pred_check_branch
      %147 = sbr.rel (0) target = $region29
    $region28: #{tpu_custom_call.1} parent=1 // pred_region
      %148 = dma.done [#allocation4], 128
    $region29: #{tpu_custom_call.1} parent=1 // pred_fallthru
      _
    %149 = vsyncpa [#allocation3], 1
    %150 = vsyncpa [#allocation6], 1
    %151 = vsyncpa [#allocation4], 1

</llo_original>
